<compile_context>
chip_gen: v5e
topology: v5e:2x2
jax: 0.10.0
libtpu: 0.0.40
codegen_flags: <defaults>
</compile_context>

<pallas_src>
import math

import jax
import jax.numpy as jnp
from jax.experimental import pallas as pl
from jax.experimental.pallas import tpu as pltpu


def correction_fn(expansion_ratio: float, d_model: int) -> int:
    return int((expansion_ratio * d_model + 255) // 256 * 256)


def _round_up(x: int, m: int) -> int:
    return (x + m - 1) // m * m


def _vmem_capacity_bytes() -> int:
    """Physical VMEM of the current chip; conservative 64 MiB fallback (v7x)."""
    try:
        info = pltpu.get_tpu_info()
        cap = getattr(info, "vmem_capacity_bytes", None)
        if cap:
            return int(cap)
    except Exception:
        pass
    return 64 * 1024 * 1024


def prepare_mlp_params(w_up, w_down, dtype):
    """One-time parameter glue (do this at setup, NOT per forward call).

    torch layout: w_up [H, D], w_down [D, H]  ->  kernel layout: [D, H], [H, D]
    and cast to the compute dtype (CastedLinear casts weights to x.dtype).
    """
    return w_up.T.astype(dtype), w_down.T.astype(dtype)


def mlp_kernel(x_ref, wup_ref, wdown_ref, o_ref, acc_ref):
    """One (tile_m x D) row-block of x against one tile_h slice of the hidden dim."""
    j = pl.program_id(1)  # hidden-dim (reduction) axis, innermost

    @pl.when(j == 0)
    def _():
        acc_ref[...] = jnp.zeros_like(acc_ref)

    x = x_ref[...]
    # up projection (partial column block) -> ReLU -> square, f32 on the MXU
    h = jnp.dot(x, wup_ref[...], preferred_element_type=jnp.float32)
    h = jnp.maximum(h, 0.0)
    h = h * h
    # partial down projection, accumulated in f32 scratch
    # (h cast back to activation dtype == CastedLinear input-dtype semantics)
    acc_ref[...] += jnp.dot(h.astype(x.dtype), wdown_ref[...],
                            preferred_element_type=jnp.float32)

    @pl.when(j == pl.num_programs(1) - 1)
    def _():
        o_ref[...] = acc_ref[...].astype(o_ref.dtype)


def _choose_tiles(M: int, D: int, H: int, itemsize: int):
    """Pick (tile_m, tile_h, vmem_cap) from the roofline + per-chip VMEM budget."""
    vmem_cap = _vmem_capacity_bytes()
    budget = int(0.85 * vmem_cap)
    small_vmem = vmem_cap <= 96 * 1024 * 1024  # v7x-class (64 MiB, 2 TCs)

    # Arithmetic intensity vs. the weight stream == tile_m (bf16); need ~512
    # to be MXU-bound on v6e, ~2x that per-TC-effective on v7x, and ~2x in f32.
    target_m = 1024 if (small_vmem or itemsize >= 4) else 512

    # MXU-aligned shrink for small M (don't pad tiny inputs to 512+ rows).
    if M <= 128:
        tile_m = 128
    else:
        tile_m = min(target_m, _round_up(M, 256))

    # Megacore guard (v7x): keep at least 2 M tiles when the input supports it
    # so both TensorCores get work.
    if small_vmem and M >= 512:
        tile_m = min(tile_m, _round_up((M + 1) // 2, 256))

    # Hidden-dim tile candidates, largest first.  tile_h == H => constant
    # weight block index => weights DMA'd into VMEM exactly once (resident).
    cands = [H]
    for th in (2048, 1024, 512, 256):
        t = th if H % th == 0 else math.gcd(H, th)
        if 0 < t < H and t not in cands:
            cands.append(t)

    def fits(tm: int, th: int) -> bool:
        w = 2 * itemsize * 2 * D * th      # both weight blocks, double-buffered
        xo = 2 * itemsize * 2 * tm * D     # x + out blocks, double-buffered
        acc = 4 * tm * D                   # f32 accumulator scratch
        h_tmp = 4 * tm * th                # f32 up-projection intermediate
        return w + xo + acc + h_tmp <= budget

    while True:
        for th in cands:
            if fits(tile_m, th):
                return tile_m, th, vmem_cap
        if tile_m <= 128:
            return tile_m, cands[-1], vmem_cap  # best effort
        tile_m = max(128, tile_m // 2)


def mlp_pallas(x, w_up_t, w_down_t):
    """x: [..., D]; w_up_t: [D, H]; w_down_t: [H, D] (already prepared)."""
    orig_shape = x.shape
    D = orig_shape[-1]
    H = w_up_t.shape[1]
    itemsize = jnp.dtype(x.dtype).itemsize

    x2d = x.reshape(-1, D)
    M = x2d.shape[0]

    tile_m, tile_h, vmem_cap = _choose_tiles(M, D, H, itemsize)

    M_pad = _round_up(M, tile_m)
    if M_pad != M:
        x2d = jnp.pad(x2d, ((0, M_pad - M), (0, 0)))

    num_m = M_pad // tile_m
    num_h = H // tile_h
    grid = (num_m, num_h)

    # Advisory cost estimate for the XLA scheduler.
    weight_stream = (1 if tile_h == H else num_m) * 2 * D * H * itemsize
    cost = pl.CostEstimate(
        flops=4 * M_pad * D * H,                       # two matmuls
        transcendentals=0,
        bytes_accessed=weight_stream + 2 * M_pad * D * itemsize,
    )

    # Per-generation scoped-VMEM limit with ~13% headroom.
    vmem_limit = int(0.87 * vmem_cap)

    out = pl.pallas_call(
        mlp_kernel,
        out_shape=jax.ShapeDtypeStruct((M_pad, D), x.dtype),
        grid_spec=pltpu.PrefetchScalarGridSpec(
            num_scalar_prefetch=0,
            grid=grid,
            in_specs=[
                pl.BlockSpec((tile_m, D), lambda i, j: (i, 0)),   # x row tile
                pl.BlockSpec((D, tile_h), lambda i, j: (0, j)),   # W_up column tile
                pl.BlockSpec((tile_h, D), lambda i, j: (j, 0)),   # W_down row tile
            ],
            out_specs=pl.BlockSpec((tile_m, D), lambda i, j: (i, 0)),
            scratch_shapes=[pltpu.VMEM((tile_m, D), jnp.float32)],
        ),
        compiler_params=pltpu.CompilerParams(
            dimension_semantics=("parallel", "arbitrary"),
            vmem_limit_bytes=vmem_limit,
        ),
        cost_estimate=cost,
    )(x2d, w_up_t, w_down_t)

    if M_pad != M:
        out = out[:M]
    return out.reshape(orig_shape)


def mlp_reference(x, w_up, w_down):
    """Pure-JAX reference in torch weight layout ([out, in])."""
    h = jnp.maximum(x @ w_up.T.astype(x.dtype), 0.0)
    h = h * h
    return h @ w_down.T.astype(x.dtype)


if __name__ == "__main__":
    # Small shapes consistent with the module; D a multiple of 128 so stores
    # are lane-dense and the MXU K dim is fully fed.
    batch, seq, dim = 2, 8, 128
    expansion_ratio = 4.0
    hidden = correction_fn(expansion_ratio, dim)  # = 512

    key = jax.random.PRNGKey(0)
    kx, ku, kd = jax.random.split(key, 3)

    x = jax.random.normal(kx, (batch, seq, dim), dtype=jnp.float32)
    # Torch layout: [out_features, in_features].  The PyTorch module zero-inits
    # down.weight; small random values used here so the check is non-trivial.
    w_up = jax.random.normal(ku, (hidden, dim), dtype=jnp.float32) * 0.02
    w_down = jax.random.normal(kd, (dim, hidden), dtype=jnp.float32) * 0.02

    # ---- f32 path (strict check) ----
    w_up_t, w_down_t = prepare_mlp_params(w_up, w_down, x.dtype)
    y = jax.block_until_ready(mlp_pallas(x, w_up_t, w_down_t))
    y_ref = mlp_reference(x, w_up, w_down)
    assert y.shape == x.shape
    assert jnp.allclose(y, y_ref, atol=1e-4, rtol=1e-4), "f32 mismatch vs reference"

    # ---- bf16 path (the production dtype; loose tolerance) ----
    x_bf = x.astype(jnp.bfloat16)
    w_up_bf, w_down_bf = prepare_mlp_params(w_up, w_down, jnp.bfloat16)
    y_bf = jax.block_until_ready(mlp_pallas(x_bf, w_up_bf, w_down_bf))
    assert y_bf.shape == x.shape
    assert bool(jnp.all(jnp.isfinite(y_bf.astype(jnp.float32))))
    assert jnp.allclose(y_bf.astype(jnp.float32), y_ref, atol=3e-2, rtol=3e-2), \
        "bf16 mismatch vs reference"

    print("KERNEL_OK")
</pallas_src>

<mosaic_0001>
module attributes {stable_mosaic.version = 11 : i64} {
  func.func @mlp_kernel(%arg0: i32, %arg1: i32, %arg2: memref<128x128xf32, #tpu.memory_space<vmem>>, %arg3: memref<128x512xf32, #tpu.memory_space<vmem>>, %arg4: memref<512x128xf32, #tpu.memory_space<vmem>>, %arg5: memref<128x128xf32, #tpu.memory_space<vmem>>, %arg6: memref<128x128xf32, #tpu.memory_space<vmem>>) attributes {dimension_semantics = [#tpu.dimension_semantics<parallel>, #tpu.dimension_semantics<arbitrary>], iteration_bounds = array<i64: 1, 1>, scalar_prefetch = 0 : i64, scratch_operands = 1 : i64, tpu.core_type = #tpu.core_type<tc>, window_params = [{transform_indices = @transform_0, window_bounds = array<i64: 128, 128>}, {transform_indices = @transform_1, window_bounds = array<i64: 128, 512>}, {transform_indices = @transform_2, window_bounds = array<i64: 512, 128>}, {transform_indices = @transform_3, window_bounds = array<i64: 128, 128>}]} {
    %c0_i32 = arith.constant 0 : i32
    %0 = arith.cmpi eq, %arg1, %c0_i32 : i32
    %1 = arith.extui %0 : i1 to i32
    %c0_i32_0 = arith.constant 0 : i32
    %2 = arith.cmpi ne, %1, %c0_i32_0 : i32
    scf.if %2 {
      %cst_14 = arith.constant 0.000000e+00 : f32
      %17 = vector.broadcast %cst_14 : f32 to vector<128x128xf32>
      %c0_15 = arith.constant 0 : index
      %c0_16 = arith.constant 0 : index
      %18 = vector.load %arg6[%c0_15, %c0_16] : memref<128x128xf32, #tpu.memory_space<vmem>>, vector<128x128xf32>
      tpu.vector_store %arg6[%c0_15, %c0_16], %17 {strides = array<i32>} : memref<128x128xf32, #tpu.memory_space<vmem>>, vector<128x128xf32>,
    } else {
    }
    %c0 = arith.constant 0 : index
    %c0_1 = arith.constant 0 : index
    %3 = vector.load %arg2[%c0, %c0_1] : memref<128x128xf32, #tpu.memory_space<vmem>>, vector<128x128xf32>
    %c0_2 = arith.constant 0 : index
    %c0_3 = arith.constant 0 : index
    %4 = vector.load %arg3[%c0_2, %c0_3] : memref<128x512xf32, #tpu.memory_space<vmem>>, vector<128x512xf32>
    %cst = arith.constant dense<0.000000e+00> : vector<128x512xf32>
    %5 = tpu.matmul %3, %4, %cst {dimension_numbers = #tpu.dot_dimension_numbers<[1], [0], [0], [1], [0, 0, 1, 1], [], []>} : vector<128x128xf32>, vector<128x512xf32>, vector<128x512xf32> -> vector<128x512xf32>
    %cst_4 = arith.constant 0.000000e+00 : f32
    %6 = vector.broadcast %cst_4 : f32 to vector<128x512xf32>
    %7 = arith.maximumf %5, %6 : vector<128x512xf32>
    %8 = arith.mulf %7, %7 : vector<128x512xf32>
    %c0_5 = arith.constant 0 : index
    %c0_6 = arith.constant 0 : index
    %9 = vector.load %arg6[%c0_5, %c0_6] : memref<128x128xf32, #tpu.memory_space<vmem>>, vector<128x128xf32>
    %c0_7 = arith.constant 0 : index
    %c0_8 = arith.constant 0 : index
    %10 = vector.load %arg4[%c0_7, %c0_8] : memref<512x128xf32, #tpu.memory_space<vmem>>, vector<512x128xf32>
    %cst_9 = arith.constant dense<0.000000e+00> : vector<128x128xf32>
    %11 = tpu.matmul %8, %10, %cst_9 {dimension_numbers = #tpu.dot_dimension_numbers<[1], [0], [0], [1], [0, 0, 1, 1], [], []>} : vector<128x512xf32>, vector<512x128xf32>, vector<128x128xf32> -> vector<128x128xf32>
    %12 = arith.addf %9, %11 : vector<128x128xf32>
    %c0_10 = arith.constant 0 : index
    %c0_11 = arith.constant 0 : index
    %13 = vector.load %arg6[%c0_10, %c0_11] : memref<128x128xf32, #tpu.memory_space<vmem>>, vector<128x128xf32>
    tpu.vector_store %arg6[%c0_10, %c0_11], %12 {strides = array<i32>} : memref<128x128xf32, #tpu.memory_space<vmem>>, vector<128x128xf32>,
    %c0_i32_12 = arith.constant 0 : i32
    %14 = arith.cmpi eq, %arg1, %c0_i32_12 : i32
    %15 = arith.extui %14 : i1 to i32
    %c0_i32_13 = arith.constant 0 : i32
    %16 = arith.cmpi ne, %15, %c0_i32_13 : i32
    scf.if %16 {
      %c0_14 = arith.constant 0 : index
      %c0_15 = arith.constant 0 : index
      %17 = vector.load %arg6[%c0_14, %c0_15] : memref<128x128xf32, #tpu.memory_space<vmem>>, vector<128x128xf32>
      %c0_16 = arith.constant 0 : index
      %c0_17 = arith.constant 0 : index
      %18 = vector.load %arg5[%c0_16, %c0_17] : memref<128x128xf32, #tpu.memory_space<vmem>>, vector<128x128xf32>
      tpu.vector_store %arg5[%c0_16, %c0_17], %17 {strides = array<i32>} : memref<128x128xf32, #tpu.memory_space<vmem>>, vector<128x128xf32>,
    } else {
    }
    return
  }
  func.func @transform_0(%arg0: i32, %arg1: i32) -> (i32, i32) {
    %c0_i32 = arith.constant 0 : i32
    %c0_i32_0 = arith.constant 0 : i32
    return %arg0, %c0_i32 : i32, i32
  }
  func.func @transform_1(%arg0: i32, %arg1: i32) -> (i32, i32) {
    %c0_i32 = arith.constant 0 : i32
    %c0_i32_0 = arith.constant 0 : i32
    return %c0_i32, %arg1 : i32, i32
  }
  func.func @transform_2(%arg0: i32, %arg1: i32) -> (i32, i32) {
    %c0_i32 = arith.constant 0 : i32
    %c0_i32_0 = arith.constant 0 : i32
    return %arg1, %c0_i32 : i32, i32
  }
  func.func @transform_3(%arg0: i32, %arg1: i32) -> (i32, i32) {
    %c0_i32 = arith.constant 0 : i32
    %c0_i32_0 = arith.constant 0 : i32
    return %arg0, %c0_i32 : i32, i32
  }
}

</mosaic_0001>

<llo_original>
// kernel: tpu_custom_call.1
$region0: #{tpu_custom_call.1}
  #allocation0 [shape = 'u32[]', space=smem, size = 0x4, offset = 0x4, fixed_abs, tag = 'smem constant byte address 0x4 - core index']
  #allocation1 [shape = 'u32[72,128]{1,0:T(1,128)}', space=vmem, size = 0x9000, scoped, tag = 'internal scratch']
  #allocation2 [shape = 'f32[128,128]{1,0:T(8,128)}', space=vmem, size = 0x10000, scoped, tag = 'scratch operand']
  %s0 = inlined_call_operand.hbm [shape: f32[128,128], index: 0, kind: input, shape index: {}]
  %s1 = inlined_call_operand.hbm [shape: f32[128,512], index: 1, kind: input, shape index: {}]
  %s2 = inlined_call_operand.hbm [shape: f32[512,128], index: 2, kind: input, shape index: {}]
  %s3 = inlined_call_operand.hbm [shape: f32[128,128], index: 3, kind: output, shape index: {}]
  %s4 = sld [smem:[#allocation0]]
  $region42: #{tpu_custom_call.1} parent=0
    _
  %s6 = ssub.s32 1, %s4
  %s7 = scalar_select 0, %s6, %s4
  $region1: #{tpu_custom_call.1} parent=0
    #allocation3 [shape = 'u8[65536]{0}', space=vmem, size = 0x10000, scoped, tag = 'input window, operand 0, single buffered']
    #allocation4 [shape = 's32[1]{0}', space=sflag, size = 0x4, scoped, tag = 'scoped memory for tpu_custom_call.1']
    #allocation5 [shape = 's32[1]{0}', space=sflag, size = 0x4, scoped, tag = 'scoped memory for tpu_custom_call.1']
    #allocation6 [shape = 'u8[262144]{0}', space=vmem, size = 0x40000, scoped, tag = 'input window, operand 1, single buffered']
    #allocation7 [shape = 's32[1]{0}', space=sflag, size = 0x4, scoped, tag = 'scoped memory for tpu_custom_call.1']
    #allocation8 [shape = 'u8[262144]{0}', space=vmem, size = 0x40000, scoped, tag = 'input window, operand 2, single buffered']
    #allocation9 [shape = 'u8[65536]{0}', space=vmem, size = 0x10000, scoped, tag = 'output window, operand 0, single buffered']
    %8 = vsyncpa [#allocation4], 0
    %9 = vsyncpa [#allocation7], 0
    %10 = vsyncpa [#allocation5], 0
    // Predicated region
    $region2: #{tpu_custom_call.1} parent=1 // pred_check
      _
    $region3: #{tpu_custom_call.1} parent=1 // pred_check_branch
      %12 = sbr.rel (0) target = $region5
    $region4: #{tpu_custom_call.1} parent=1 // pred_region
      %14 = vsyncadd [#allocation4], 0
      %s15 = sshll.u32 %s0, 4
      %s16 = int_to_ptr.hbm [resolvable:$true] %s15
      %s17 = sshll.u32 [#allocation3], 4
      %s18 = int_to_ptr.vmem [resolvable:$true] %s17
      %23 = dma.hbm_to_vmem [thread:$0]  %s16, 2048, %s18, [#allocation4], 128, 128, 8
    $region5: #{tpu_custom_call.1} parent=1 // pred_fallthru
      _
    // Predicated region
    $region6: #{tpu_custom_call.1} parent=1 // pred_check
      _
    $region7: #{tpu_custom_call.1} parent=1 // pred_check_branch
      %25 = sbr.rel (0) target = $region9
    $region8: #{tpu_custom_call.1} parent=1 // pred_region
      %27 = vsyncadd [#allocation7], 0
      %s28 = sshll.u32 %s1, 4
      %s29 = int_to_ptr.hbm [resolvable:$true] %s28
      %s30 = sshll.u32 [#allocation6], 4
      %s31 = int_to_ptr.vmem [resolvable:$true] %s30
      %36 = dma.hbm_to_vmem [thread:$0]  %s29, 8192, %s31, [#allocation7], 512, 512, 32
    $region9: #{tpu_custom_call.1} parent=1 // pred_fallthru
      _
    // Predicated region
    $region10: #{tpu_custom_call.1} parent=1 // pred_check
      _
    $region11: #{tpu_custom_call.1} parent=1 // pred_check_branch
      %38 = sbr.rel (0) target = $region13
    $region12: #{tpu_custom_call.1} parent=1 // pred_region
      %40 = vsyncadd [#allocation7], 0
      %s41 = sshll.u32 %s2, 4
      %s42 = int_to_ptr.hbm [resolvable:$true] %s41
      %s43 = sshll.u32 [#allocation8], 4
      %s44 = int_to_ptr.vmem [resolvable:$true] %s43
      %49 = dma.hbm_to_vmem [thread:$0]  %s42, 8192, %s44, [#allocation7], 128, 128, 8
    $region13: #{tpu_custom_call.1} parent=1 // pred_fallthru
      _
    // Predicated region
    $region14: #{tpu_custom_call.1} parent=1 // pred_check
      _
    $region15: #{tpu_custom_call.1} parent=1 // pred_check_branch
      %51 = sbr.rel (0) target = $region17
    $region16: #{tpu_custom_call.1} parent=1 // pred_region
      %53 = dma.done [#allocation4], 2048
    $region17: #{tpu_custom_call.1} parent=1 // pred_fallthru
      _
    // Predicated region
    $region18: #{tpu_custom_call.1} parent=1 // pred_check
      _
    $region19: #{tpu_custom_call.1} parent=1 // pred_check_branch
      %55 = sbr.rel (0) target = $region21
    $region20: #{tpu_custom_call.1} parent=1 // pred_region
      %57 = dma.done [#allocation7], 8192
    $region21: #{tpu_custom_call.1} parent=1 // pred_fallthru
      _
    // Predicated region
    $region22: #{tpu_custom_call.1} parent=1 // pred_check
      _
    $region23: #{tpu_custom_call.1} parent=1 // pred_check_branch
      %59 = sbr.rel (0) target = $region25
    $region24: #{tpu_custom_call.1} parent=1 // pred_region
      %61 = dma.done [#allocation7], 8192
    $region25: #{tpu_custom_call.1} parent=1 // pred_fallthru
      _
    %p62 = scmp.eq.s32.totalorder 0, 0
    // Predicated region
    $region26: #{tpu_custom_call.1} parent=1 // pred_check
      %p63 = pneg %p62
    $region27: #{tpu_custom_call.1} parent=1 // pred_check_branch
      %65 = sbr.rel (%p63) target = $region29
    $region28: #{tpu_custom_call.1} parent=1 // pred_region
      %66 = vst [vmem:[#allocation2] sm:$0xff] 0.0
      %67 = vst [vmem:[#allocation2 + $0x8] sm:$0xff] 0.0
      %68 = vst [vmem:[#allocation2 + $0x10] sm:$0xff] 0.0
      %69 = vst [vmem:[#allocation2 + $0x18] sm:$0xff] 0.0
      %70 = vst [vmem:[#allocation2 + $0x20] sm:$0xff] 0.0
      %71 = vst [vmem:[#allocation2 + $0x28] sm:$0xff] 0.0
      %72 = vst [vmem:[#allocation2 + $0x30] sm:$0xff] 0.0
      %73 = vst [vmem:[#allocation2 + $0x38] sm:$0xff] 0.0
      %74 = vst [vmem:[#allocation2 + $0x40] sm:$0xff] 0.0
      %75 = vst [vmem:[#allocation2 + $0x48] sm:$0xff] 0.0
      %76 = vst [vmem:[#allocation2 + $0x50] sm:$0xff] 0.0
      %77 = vst [vmem:[#allocation2 + $0x58] sm:$0xff] 0.0
      %78 = vst [vmem:[#allocation2 + $0x60] sm:$0xff] 0.0
      %79 = vst [vmem:[#allocation2 + $0x68] sm:$0xff] 0.0
      %80 = vst [vmem:[#allocation2 + $0x70] sm:$0xff] 0.0
      %81 = vst [vmem:[#allocation2 + $0x78] sm:$0xff] 0.0
    $region29: #{tpu_custom_call.1} parent=1 // pred_fallthru
      _
    %v82 = vld [vmem:[#allocation3] sm:$0xff]
    %v83 = vld [vmem:[#allocation3 + $0x8] sm:$0xff]
    %v84 = vld [vmem:[#allocation3 + $0x10] sm:$0xff]
    %v85 = vld [vmem:[#allocation3 + $0x18] sm:$0xff]
    %v86 = vld [vmem:[#allocation3 + $0x20] sm:$0xff]
    %v87 = vld [vmem:[#allocation3 + $0x28] sm:$0xff]
    %v88 = vld [vmem:[#allocation3 + $0x30] sm:$0xff]
    %v89 = vld [vmem:[#allocation3 + $0x38] sm:$0xff]
    %v90 = vld [vmem:[#allocation3 + $0x40] sm:$0xff]
    %v91 = vld [vmem:[#allocation3 + $0x48] sm:$0xff]
    %v92 = vld [vmem:[#allocation3 + $0x50] sm:$0xff]
    %v93 = vld [vmem:[#allocation3 + $0x58] sm:$0xff]
    %v94 = vld [vmem:[#allocation3 + $0x60] sm:$0xff]
    %v95 = vld [vmem:[#allocation3 + $0x68] sm:$0xff]
    %v96 = vld [vmem:[#allocation3 + $0x70] sm:$0xff]
    %v97 = vld [vmem:[#allocation3 + $0x78] sm:$0xff]
    %v98 = vld [vmem:[#allocation6] sm:$0xff]
    %v99 = vld [vmem:[#allocation6 + $0x8] sm:$0xff]
    %v100 = vld [vmem:[#allocation6 + $0x10] sm:$0xff]
    %v101 = vld [vmem:[#allocation6 + $0x18] sm:$0xff]
    %v102 = vld [vmem:[#allocation6 + $0x20] sm:$0xff]
    %v103 = vld [vmem:[#allocation6 + $0x28] sm:$0xff]
    %v104 = vld [vmem:[#allocation6 + $0x30] sm:$0xff]
    %v105 = vld [vmem:[#allocation6 + $0x38] sm:$0xff]
    %v106 = vld [vmem:[#allocation6 + $0x40] sm:$0xff]
    %v107 = vld [vmem:[#allocation6 + $0x48] sm:$0xff]
    %v108 = vld [vmem:[#allocation6 + $0x50] sm:$0xff]
    %v109 = vld [vmem:[#allocation6 + $0x58] sm:$0xff]
    %v110 = vld [vmem:[#allocation6 + $0x60] sm:$0xff]
    %v111 = vld [vmem:[#allocation6 + $0x68] sm:$0xff]
    %v112 = vld [vmem:[#allocation6 + $0x70] sm:$0xff]
    %v113 = vld [vmem:[#allocation6 + $0x78] sm:$0xff]
    %v114 = vld [vmem:[#allocation6 + $0x80] sm:$0xff]
    %v115 = vld [vmem:[#allocation6 + $0x88] sm:$0xff]
    %v116 = vld [vmem:[#allocation6 + $0x90] sm:$0xff]
    %v117 = vld [vmem:[#allocation6 + $0x98] sm:$0xff]
    %v118 = vld [vmem:[#allocation6 + $0xa0] sm:$0xff]
    %v119 = vld [vmem:[#allocation6 + $0xa8] sm:$0xff]
    %v120 = vld [vmem:[#allocation6 + $0xb0] sm:$0xff]
    %v121 = vld [vmem:[#allocation6 + $0xb8] sm:$0xff]
    %v122 = vld [vmem:[#allocation6 + $0xc0] sm:$0xff]
    %v123 = vld [vmem:[#allocation6 + $0xc8] sm:$0xff]
    %v124 = vld [vmem:[#allocation6 + $0xd0] sm:$0xff]
    %v125 = vld [vmem:[#allocation6 + $0xd8] sm:$0xff]
    %v126 = vld [vmem:[#allocation6 + $0xe0] sm:$0xff]
    %v127 = vld [vmem:[#allocation6 + $0xe8] sm:$0xff]
    %v128 = vld [vmem:[#allocation6 + $0xf0] sm:$0xff]
    %v129 = vld [vmem:[#allocation6 + $0xf8] sm:$0xff]
    %v130 = vld [vmem:[#allocation6 + $0x100] sm:$0xff]
    %v131 = vld [vmem:[#allocation6 + $0x108] sm:$0xff]
    %v132 = vld [vmem:[#allocation6 + $0x110] sm:$0xff]
    %v133 = vld [vmem:[#allocation6 + $0x118] sm:$0xff]
    %v134 = vld [vmem:[#allocation6 + $0x120] sm:$0xff]
    %v135 = vld [vmem:[#allocation6 + $0x128] sm:$0xff]
    %v136 = vld [vmem:[#allocation6 + $0x130] sm:$0xff]
    %v137 = vld [vmem:[#allocation6 + $0x138] sm:$0xff]
    %v138 = vld [vmem:[#allocation6 + $0x140] sm:$0xff]
    %v139 = vld [vmem:[#allocation6 + $0x148] sm:$0xff]
    %v140 = vld [vmem:[#allocation6 + $0x150] sm:$0xff]
    %v141 = vld [vmem:[#allocation6 + $0x158] sm:$0xff]
    %v142 = vld [vmem:[#allocation6 + $0x160] sm:$0xff]
    %v143 = vld [vmem:[#allocation6 + $0x168] sm:$0xff]
    %v144 = vld [vmem:[#allocation6 + $0x170] sm:$0xff]
    %v145 = vld [vmem:[#allocation6 + $0x178] sm:$0xff]
    %v146 = vld [vmem:[#allocation6 + $0x180] sm:$0xff]
    %v147 = vld [vmem:[#allocation6 + $0x188] sm:$0xff]
    %v148 = vld [vmem:[#allocation6 + $0x190] sm:$0xff]
    %v149 = vld [vmem:[#allocation6 + $0x198] sm:$0xff]
    %v150 = vld [vmem:[#allocation6 + $0x1a0] sm:$0xff]
    %v151 = vld [vmem:[#allocation6 + $0x1a8] sm:$0xff]
    %v152 = vld [vmem:[#allocation6 + $0x1b0] sm:$0xff]
    %v153 = vld [vmem:[#allocation6 + $0x1b8] sm:$0xff]
    %v154 = vld [vmem:[#allocation6 + $0x1c0] sm:$0xff]
    %v155 = vld [vmem:[#allocation6 + $0x1c8] sm:$0xff]
    %v156 = vld [vmem:[#allocation6 + $0x1d0] sm:$0xff]
    %v157 = vld [vmem:[#allocation6 + $0x1d8] sm:$0xff]
    %v158 = vld [vmem:[#allocation6 + $0x1e0] sm:$0xff]
    %v159 = vld [vmem:[#allocation6 + $0x1e8] sm:$0xff]
    %v160 = vld [vmem:[#allocation6 + $0x1f0] sm:$0xff]
    %v161 = vld [vmem:[#allocation6 + $0x1f8] sm:$0xff]
    %162 = vmatpush.msra.mxu0 %v158
    %163 = vmatpush.msra.mxu0 %v154
    %164 = vmatpush.msra.mxu0 %v150
    %165 = vmatpush.msra.mxu0 %v146
    %166 = vmatpush.msra.mxu0 %v142
    %167 = vmatpush.msra.mxu0 %v138
    %168 = vmatpush.msra.mxu0 %v134
    %169 = vmatpush.msra.mxu0 %v130
    %170 = vmatpush.msra.mxu0 %v126
    %171 = vmatpush.msra.mxu0 %v122
    %172 = vmatpush.msra.mxu0 %v118
    %173 = vmatpush.msra.mxu0 %v114
    %174 = vmatpush.msra.mxu0 %v110
    %175 = vmatpush.msra.mxu0 %v106
    %176 = vmatpush.msra.mxu0 %v102
    %177 = vmatpush.msra.mxu0 %v98
    %178 = vmatmul.f32.gmra.mxu0 %v82
    %v179 = vpop.f32.mrf.mxu0
    %v180 = vadd.f32 0.0, %v179
    %181 = vmatmul.f32.gmra.mxu0 %v83
    %v182 = vpop.f32.mrf.mxu0
    %v183 = vadd.f32 0.0, %v182
    %184 = vmatmul.f32.gmra.mxu0 %v84
    %v185 = vpop.f32.mrf.mxu0
    %v186 = vadd.f32 0.0, %v185
    %187 = vmatmul.f32.gmra.mxu0 %v85
    %v188 = vpop.f32.mrf.mxu0
    %v189 = vadd.f32 0.0, %v188
    %190 = vmatmul.f32.gmra.mxu0 %v86
    %v191 = vpop.f32.mrf.mxu0
    %v192 = vadd.f32 0.0, %v191
    %193 = vmatmul.f32.gmra.mxu0 %v87
    %v194 = vpop.f32.mrf.mxu0
    %v195 = vadd.f32 0.0, %v194
    %196 = vmatmul.f32.gmra.mxu0 %v88
    %v197 = vpop.f32.mrf.mxu0
    %v198 = vadd.f32 0.0, %v197
    %199 = vmatmul.f32.gmra.mxu0 %v89
    %v200 = vpop.f32.mrf.mxu0
    %v201 = vadd.f32 0.0, %v200
    %202 = vmatmul.f32.gmra.mxu0 %v90
    %v203 = vpop.f32.mrf.mxu0
    %v204 = vadd.f32 0.0, %v203
    %205 = vmatmul.f32.gmra.mxu0 %v91
    %v206 = vpop.f32.mrf.mxu0
    %v207 = vadd.f32 0.0, %v206
    %208 = vmatmul.f32.gmra.mxu0 %v92
    %v209 = vpop.f32.mrf.mxu0
    %v210 = vadd.f32 0.0, %v209
    %211 = vmatmul.f32.gmra.mxu0 %v93
    %v212 = vpop.f32.mrf.mxu0
    %v213 = vadd.f32 0.0, %v212
    %214 = vmatmul.f32.gmra.mxu0 %v94
    %v215 = vpop.f32.mrf.mxu0
    %v216 = vadd.f32 0.0, %v215
    %217 = vmatmul.f32.gmra.mxu0 %v95
    %v218 = vpop.f32.mrf.mxu0
    %v219 = vadd.f32 0.0, %v218
    %220 = vmatmul.f32.gmra.mxu0 %v96
    %v221 = vpop.f32.mrf.mxu0
    %v222 = vadd.f32 0.0, %v221
    %223 = vmatmul.f32.gmra.mxu0 %v97
    %v224 = vpop.f32.mrf.mxu0
    %v225 = vadd.f32 0.0, %v224
    %226 = vdwg.mxu0
    %227 = vmatpush.msra.mxu0 %v159
    %228 = vmatpush.msra.mxu0 %v155
    %229 = vmatpush.msra.mxu0 %v151
    %230 = vmatpush.msra.mxu0 %v147
    %231 = vmatpush.msra.mxu0 %v143
    %232 = vmatpush.msra.mxu0 %v139
    %233 = vmatpush.msra.mxu0 %v135
    %234 = vmatpush.msra.mxu0 %v131
    %235 = vmatpush.msra.mxu0 %v127
    %236 = vmatpush.msra.mxu0 %v123
    %237 = vmatpush.msra.mxu0 %v119
    %238 = vmatpush.msra.mxu0 %v115
    %239 = vmatpush.msra.mxu0 %v111
    %240 = vmatpush.msra.mxu0 %v107
    %241 = vmatpush.msra.mxu0 %v103
    %242 = vmatpush.msra.mxu0 %v99
    %243 = vmatmul.f32.gmra.mxu0 %v82
    %v244 = vpop.f32.mrf.mxu0
    %v245 = vadd.f32 0.0, %v244
    %246 = vmatmul.f32.gmra.mxu0 %v83
    %v247 = vpop.f32.mrf.mxu0
    %v248 = vadd.f32 0.0, %v247
    %249 = vmatmul.f32.gmra.mxu0 %v84
    %v250 = vpop.f32.mrf.mxu0
    %v251 = vadd.f32 0.0, %v250
    %252 = vmatmul.f32.gmra.mxu0 %v85
    %v253 = vpop.f32.mrf.mxu0
    %v254 = vadd.f32 0.0, %v253
    %255 = vmatmul.f32.gmra.mxu0 %v86
    %v256 = vpop.f32.mrf.mxu0
    %v257 = vadd.f32 0.0, %v256
    %258 = vmatmul.f32.gmra.mxu0 %v87
    %v259 = vpop.f32.mrf.mxu0
    %v260 = vadd.f32 0.0, %v259
    %261 = vmatmul.f32.gmra.mxu0 %v88
    %v262 = vpop.f32.mrf.mxu0
    %v263 = vadd.f32 0.0, %v262
    %264 = vmatmul.f32.gmra.mxu0 %v89
    %v265 = vpop.f32.mrf.mxu0
    %v266 = vadd.f32 0.0, %v265
    %267 = vmatmul.f32.gmra.mxu0 %v90
    %v268 = vpop.f32.mrf.mxu0
    %v269 = vadd.f32 0.0, %v268
    %270 = vmatmul.f32.gmra.mxu0 %v91
    %v271 = vpop.f32.mrf.mxu0
    %v272 = vadd.f32 0.0, %v271
    %273 = vmatmul.f32.gmra.mxu0 %v92
    %v274 = vpop.f32.mrf.mxu0
    %v275 = vadd.f32 0.0, %v274
    %276 = vmatmul.f32.gmra.mxu0 %v93
    %v277 = vpop.f32.mrf.mxu0
    %v278 = vadd.f32 0.0, %v277
    %279 = vmatmul.f32.gmra.mxu0 %v94
    %v280 = vpop.f32.mrf.mxu0
    %v281 = vadd.f32 0.0, %v280
    %282 = vmatmul.f32.gmra.mxu0 %v95
    %v283 = vpop.f32.mrf.mxu0
    %v284 = vadd.f32 0.0, %v283
    %285 = vmatmul.f32.gmra.mxu0 %v96
    %v286 = vpop.f32.mrf.mxu0
    %v287 = vadd.f32 0.0, %v286
    %288 = vmatmul.f32.gmra.mxu0 %v97
    %v289 = vpop.f32.mrf.mxu0
    %v290 = vadd.f32 0.0, %v289
    %291 = vdwg.mxu0
    %292 = vmatpush.msra.mxu0 %v160
    %293 = vmatpush.msra.mxu0 %v156
    %294 = vmatpush.msra.mxu0 %v152
    %295 = vmatpush.msra.mxu0 %v148
    %296 = vmatpush.msra.mxu0 %v144
    %297 = vmatpush.msra.mxu0 %v140
    %298 = vmatpush.msra.mxu0 %v136
    %299 = vmatpush.msra.mxu0 %v132
    %300 = vmatpush.msra.mxu0 %v128
    %301 = vmatpush.msra.mxu0 %v124
    %302 = vmatpush.msra.mxu0 %v120
    %303 = vmatpush.msra.mxu0 %v116
    %304 = vmatpush.msra.mxu0 %v112
    %305 = vmatpush.msra.mxu0 %v108
    %306 = vmatpush.msra.mxu0 %v104
    %307 = vmatpush.msra.mxu0 %v100
    %308 = vmatmul.f32.gmra.mxu0 %v82
    %v309 = vpop.f32.mrf.mxu0
    %v310 = vadd.f32 0.0, %v309
    %311 = vmatmul.f32.gmra.mxu0 %v83
    %v312 = vpop.f32.mrf.mxu0
    %v313 = vadd.f32 0.0, %v312
    %314 = vmatmul.f32.gmra.mxu0 %v84
    %v315 = vpop.f32.mrf.mxu0
    %v316 = vadd.f32 0.0, %v315
    %317 = vmatmul.f32.gmra.mxu0 %v85
    %v318 = vpop.f32.mrf.mxu0
    %v319 = vadd.f32 0.0, %v318
    %320 = vmatmul.f32.gmra.mxu0 %v86
    %v321 = vpop.f32.mrf.mxu0
    %v322 = vadd.f32 0.0, %v321
    %323 = vmatmul.f32.gmra.mxu0 %v87
    %v324 = vpop.f32.mrf.mxu0
    %v325 = vadd.f32 0.0, %v324
    %326 = vmatmul.f32.gmra.mxu0 %v88
    %v327 = vpop.f32.mrf.mxu0
    %v328 = vadd.f32 0.0, %v327
    %329 = vmatmul.f32.gmra.mxu0 %v89
    %v330 = vpop.f32.mrf.mxu0
    %v331 = vadd.f32 0.0, %v330
    %332 = vmatmul.f32.gmra.mxu0 %v90
    %v333 = vpop.f32.mrf.mxu0
    %v334 = vadd.f32 0.0, %v333
    %335 = vmatmul.f32.gmra.mxu0 %v91
    %v336 = vpop.f32.mrf.mxu0
    %v337 = vadd.f32 0.0, %v336
    %338 = vmatmul.f32.gmra.mxu0 %v92
    %v339 = vpop.f32.mrf.mxu0
    %v340 = vadd.f32 0.0, %v339
    %341 = vmatmul.f32.gmra.mxu0 %v93
    %v342 = vpop.f32.mrf.mxu0
    %v343 = vadd.f32 0.0, %v342
    %344 = vmatmul.f32.gmra.mxu0 %v94
    %v345 = vpop.f32.mrf.mxu0
    %v346 = vadd.f32 0.0, %v345
    %347 = vmatmul.f32.gmra.mxu0 %v95
    %v348 = vpop.f32.mrf.mxu0
    %v349 = vadd.f32 0.0, %v348
    %350 = vmatmul.f32.gmra.mxu0 %v96
    %v351 = vpop.f32.mrf.mxu0
    %v352 = vadd.f32 0.0, %v351
    %353 = vmatmul.f32.gmra.mxu0 %v97
    %v354 = vpop.f32.mrf.mxu0
    %v355 = vadd.f32 0.0, %v354
    %356 = vdwg.mxu0
    %357 = vmatpush.msra.mxu0 %v161
    %358 = vmatpush.msra.mxu0 %v157
    %359 = vmatpush.msra.mxu0 %v153
    %360 = vmatpush.msra.mxu0 %v149
    %361 = vmatpush.msra.mxu0 %v145
    %362 = vmatpush.msra.mxu0 %v141
    %363 = vmatpush.msra.mxu0 %v137
    %364 = vmatpush.msra.mxu0 %v133
    %365 = vmatpush.msra.mxu0 %v129
    %366 = vmatpush.msra.mxu0 %v125
    %367 = vmatpush.msra.mxu0 %v121
    %368 = vmatpush.msra.mxu0 %v117
    %369 = vmatpush.msra.mxu0 %v113
    %370 = vmatpush.msra.mxu0 %v109
    %371 = vmatpush.msra.mxu0 %v105
    %372 = vmatpush.msra.mxu0 %v101
    %373 = vmatmul.f32.gmra.mxu0 %v82
    %v374 = vpop.f32.mrf.mxu0
    %v375 = vadd.f32 0.0, %v374
    %376 = vmatmul.f32.gmra.mxu0 %v83
    %v377 = vpop.f32.mrf.mxu0
    %v378 = vadd.f32 0.0, %v377
    %379 = vmatmul.f32.gmra.mxu0 %v84
    %v380 = vpop.f32.mrf.mxu0
    %v381 = vadd.f32 0.0, %v380
    %382 = vmatmul.f32.gmra.mxu0 %v85
    %v383 = vpop.f32.mrf.mxu0
    %v384 = vadd.f32 0.0, %v383
    %385 = vmatmul.f32.gmra.mxu0 %v86
    %v386 = vpop.f32.mrf.mxu0
    %v387 = vadd.f32 0.0, %v386
    %388 = vmatmul.f32.gmra.mxu0 %v87
    %v389 = vpop.f32.mrf.mxu0
    %v390 = vadd.f32 0.0, %v389
    %391 = vmatmul.f32.gmra.mxu0 %v88
    %v392 = vpop.f32.mrf.mxu0
    %v393 = vadd.f32 0.0, %v392
    %394 = vmatmul.f32.gmra.mxu0 %v89
    %v395 = vpop.f32.mrf.mxu0
    %v396 = vadd.f32 0.0, %v395
    %397 = vmatmul.f32.gmra.mxu0 %v90
    %v398 = vpop.f32.mrf.mxu0
    %v399 = vadd.f32 0.0, %v398
    %400 = vmatmul.f32.gmra.mxu0 %v91
    %v401 = vpop.f32.mrf.mxu0
    %v402 = vadd.f32 0.0, %v401
    %403 = vmatmul.f32.gmra.mxu0 %v92
    %v404 = vpop.f32.mrf.mxu0
    %v405 = vadd.f32 0.0, %v404
    %406 = vmatmul.f32.gmra.mxu0 %v93
    %v407 = vpop.f32.mrf.mxu0
    %v408 = vadd.f32 0.0, %v407
    %409 = vmatmul.f32.gmra.mxu0 %v94
    %v410 = vpop.f32.mrf.mxu0
    %v411 = vadd.f32 0.0, %v410
    %412 = vmatmul.f32.gmra.mxu0 %v95
    %v413 = vpop.f32.mrf.mxu0
    %v414 = vadd.f32 0.0, %v413
    %415 = vmatmul.f32.gmra.mxu0 %v96
    %v416 = vpop.f32.mrf.mxu0
    %v417 = vadd.f32 0.0, %v416
    %418 = vmatmul.f32.gmra.mxu0 %v97
    %v419 = vpop.f32.mrf.mxu0
    %v420 = vadd.f32 0.0, %v419
    %421 = vdwg.mxu0
    %v422 = vmax.f32 %v180, 0.0
    %v423 = vmax.f32 %v245, 0.0
    %v424 = vmax.f32 %v310, 0.0
    %v425 = vmax.f32 %v375, 0.0
    %v426 = vmax.f32 %v183, 0.0
    %v427 = vmax.f32 %v248, 0.0
    %v428 = vmax.f32 %v313, 0.0
    %v429 = vmax.f32 %v378, 0.0
    %v430 = vmax.f32 %v186, 0.0
    %v431 = vmax.f32 %v251, 0.0
    %v432 = vmax.f32 %v316, 0.0
    %v433 = vmax.f32 %v381, 0.0
    %v434 = vmax.f32 %v189, 0.0
    %v435 = vmax.f32 %v254, 0.0
    %v436 = vmax.f32 %v319, 0.0
    %v437 = vmax.f32 %v384, 0.0
    %v438 = vmax.f32 %v192, 0.0
    %v439 = vmax.f32 %v257, 0.0
    %v440 = vmax.f32 %v322, 0.0
    %v441 = vmax.f32 %v387, 0.0
    %v442 = vmax.f32 %v195, 0.0
    %v443 = vmax.f32 %v260, 0.0
    %v444 = vmax.f32 %v325, 0.0
    %v445 = vmax.f32 %v390, 0.0
    %v446 = vmax.f32 %v198, 0.0
    %v447 = vmax.f32 %v263, 0.0
    %v448 = vmax.f32 %v328, 0.0
    %v449 = vmax.f32 %v393, 0.0
    %v450 = vmax.f32 %v201, 0.0
    %v451 = vmax.f32 %v266, 0.0
    %v452 = vmax.f32 %v331, 0.0
    %v453 = vmax.f32 %v396, 0.0
    %v454 = vmax.f32 %v204, 0.0
    %v455 = vmax.f32 %v269, 0.0
    %v456 = vmax.f32 %v334, 0.0
    %v457 = vmax.f32 %v399, 0.0
    %v458 = vmax.f32 %v207, 0.0
    %v459 = vmax.f32 %v272, 0.0
    %v460 = vmax.f32 %v337, 0.0
    %v461 = vmax.f32 %v402, 0.0
    %v462 = vmax.f32 %v210, 0.0
    %v463 = vmax.f32 %v275, 0.0
    %v464 = vmax.f32 %v340, 0.0
    %v465 = vmax.f32 %v405, 0.0
    %v466 = vmax.f32 %v213, 0.0
    %v467 = vmax.f32 %v278, 0.0
    %v468 = vmax.f32 %v343, 0.0
    %v469 = vmax.f32 %v408, 0.0
    %v470 = vmax.f32 %v216, 0.0
    %v471 = vmax.f32 %v281, 0.0
    %v472 = vmax.f32 %v346, 0.0
    %v473 = vmax.f32 %v411, 0.0
    %v474 = vmax.f32 %v219, 0.0
    %v475 = vmax.f32 %v284, 0.0
    %v476 = vmax.f32 %v349, 0.0
    %v477 = vmax.f32 %v414, 0.0
    %v478 = vmax.f32 %v222, 0.0
    %v479 = vmax.f32 %v287, 0.0
    %v480 = vmax.f32 %v352, 0.0
    %v481 = vmax.f32 %v417, 0.0
    %v482 = vmax.f32 %v225, 0.0
    %v483 = vmax.f32 %v290, 0.0
    %v484 = vmax.f32 %v355, 0.0
    %v485 = vmax.f32 %v420, 0.0
    %v486 = vmul.f32 %v422, %v422
    %v487 = vmul.f32 %v423, %v423
    %v488 = vmul.f32 %v424, %v424
    %v489 = vmul.f32 %v425, %v425
    %v490 = vmul.f32 %v426, %v426
    %v491 = vmul.f32 %v427, %v427
    %v492 = vmul.f32 %v428, %v428
    %v493 = vmul.f32 %v429, %v429
    %v494 = vmul.f32 %v430, %v430
    %v495 = vmul.f32 %v431, %v431
    %v496 = vmul.f32 %v432, %v432
    %v497 = vmul.f32 %v433, %v433
    %v498 = vmul.f32 %v434, %v434
    %v499 = vmul.f32 %v435, %v435
    %v500 = vmul.f32 %v436, %v436
    %v501 = vmul.f32 %v437, %v437
    %v502 = vmul.f32 %v438, %v438
    %v503 = vmul.f32 %v439, %v439
    %v504 = vmul.f32 %v440, %v440
    %v505 = vmul.f32 %v441, %v441
    %v506 = vmul.f32 %v442, %v442
    %v507 = vmul.f32 %v443, %v443
    %v508 = vmul.f32 %v444, %v444
    %v509 = vmul.f32 %v445, %v445
    %v510 = vmul.f32 %v446, %v446
    %v511 = vmul.f32 %v447, %v447
    %v512 = vmul.f32 %v448, %v448
    %v513 = vmul.f32 %v449, %v449
    %v514 = vmul.f32 %v450, %v450
    %v515 = vmul.f32 %v451, %v451
    %v516 = vmul.f32 %v452, %v452
    %v517 = vmul.f32 %v453, %v453
    %v518 = vmul.f32 %v454, %v454
    %v519 = vmul.f32 %v455, %v455
    %v520 = vmul.f32 %v456, %v456
    %v521 = vmul.f32 %v457, %v457
    %v522 = vmul.f32 %v458, %v458
    %v523 = vmul.f32 %v459, %v459
    %v524 = vmul.f32 %v460, %v460
    %v525 = vmul.f32 %v461, %v461
    %v526 = vmul.f32 %v462, %v462
    %v527 = vmul.f32 %v463, %v463
    %v528 = vmul.f32 %v464, %v464
    %v529 = vmul.f32 %v465, %v465
    %v530 = vmul.f32 %v466, %v466
    %v531 = vmul.f32 %v467, %v467
    %v532 = vmul.f32 %v468, %v468
    %v533 = vmul.f32 %v469, %v469
    %v534 = vmul.f32 %v470, %v470
    %v535 = vmul.f32 %v471, %v471
    %v536 = vmul.f32 %v472, %v472
    %v537 = vmul.f32 %v473, %v473
    %v538 = vmul.f32 %v474, %v474
    %v539 = vmul.f32 %v475, %v475
    %v540 = vmul.f32 %v476, %v476
    %v541 = vmul.f32 %v477, %v477
    %v542 = vmul.f32 %v478, %v478
    %v543 = vmul.f32 %v479, %v479
    %v544 = vmul.f32 %v480, %v480
    %v545 = vmul.f32 %v481, %v481
    %v546 = vmul.f32 %v482, %v482
    %v547 = vmul.f32 %v483, %v483
    %v548 = vmul.f32 %v484, %v484
    %v549 = vmul.f32 %v485, %v485
    %v550 = vld [vmem:[#allocation2] sm:$0xff]
    %v551 = vld [vmem:[#allocation2 + $0x8] sm:$0xff]
    %v552 = vld [vmem:[#allocation2 + $0x10] sm:$0xff]
    %v553 = vld [vmem:[#allocation2 + $0x18] sm:$0xff]
    %v554 = vld [vmem:[#allocation2 + $0x20] sm:$0xff]
    %v555 = vld [vmem:[#allocation2 + $0x28] sm:$0xff]
    %v556 = vld [vmem:[#allocation2 + $0x30] sm:$0xff]
    %v557 = vld [vmem:[#allocation2 + $0x38] sm:$0xff]
    %v558 = vld [vmem:[#allocation2 + $0x40] sm:$0xff]
    %v559 = vld [vmem:[#allocation2 + $0x48] sm:$0xff]
    %v560 = vld [vmem:[#allocation2 + $0x50] sm:$0xff]
    %v561 = vld [vmem:[#allocation2 + $0x58] sm:$0xff]
    %v562 = vld [vmem:[#allocation2 + $0x60] sm:$0xff]
    %v563 = vld [vmem:[#allocation2 + $0x68] sm:$0xff]
    %v564 = vld [vmem:[#allocation2 + $0x70] sm:$0xff]
    %v565 = vld [vmem:[#allocation2 + $0x78] sm:$0xff]
    %v566 = vld [vmem:[#allocation8] sm:$0xff]
    %v567 = vld [vmem:[#allocation8 + $0x8] sm:$0xff]
    %v568 = vld [vmem:[#allocation8 + $0x10] sm:$0xff]
    %v569 = vld [vmem:[#allocation8 + $0x18] sm:$0xff]
    %v570 = vld [vmem:[#allocation8 + $0x20] sm:$0xff]
    %v571 = vld [vmem:[#allocation8 + $0x28] sm:$0xff]
    %v572 = vld [vmem:[#allocation8 + $0x30] sm:$0xff]
    %v573 = vld [vmem:[#allocation8 + $0x38] sm:$0xff]
    %v574 = vld [vmem:[#allocation8 + $0x40] sm:$0xff]
    %v575 = vld [vmem:[#allocation8 + $0x48] sm:$0xff]
    %v576 = vld [vmem:[#allocation8 + $0x50] sm:$0xff]
    %v577 = vld [vmem:[#allocation8 + $0x58] sm:$0xff]
    %v578 = vld [vmem:[#allocation8 + $0x60] sm:$0xff]
    %v579 = vld [vmem:[#allocation8 + $0x68] sm:$0xff]
    %v580 = vld [vmem:[#allocation8 + $0x70] sm:$0xff]
    %v581 = vld [vmem:[#allocation8 + $0x78] sm:$0xff]
    %v582 = vld [vmem:[#allocation8 + $0x80] sm:$0xff]
    %v583 = vld [vmem:[#allocation8 + $0x88] sm:$0xff]
    %v584 = vld [vmem:[#allocation8 + $0x90] sm:$0xff]
    %v585 = vld [vmem:[#allocation8 + $0x98] sm:$0xff]
    %v586 = vld [vmem:[#allocation8 + $0xa0] sm:$0xff]
    %v587 = vld [vmem:[#allocation8 + $0xa8] sm:$0xff]
    %v588 = vld [vmem:[#allocation8 + $0xb0] sm:$0xff]
    %v589 = vld [vmem:[#allocation8 + $0xb8] sm:$0xff]
    %v590 = vld [vmem:[#allocation8 + $0xc0] sm:$0xff]
    %v591 = vld [vmem:[#allocation8 + $0xc8] sm:$0xff]
    %v592 = vld [vmem:[#allocation8 + $0xd0] sm:$0xff]
    %v593 = vld [vmem:[#allocation8 + $0xd8] sm:$0xff]
    %v594 = vld [vmem:[#allocation8 + $0xe0] sm:$0xff]
    %v595 = vld [vmem:[#allocation8 + $0xe8] sm:$0xff]
    %v596 = vld [vmem:[#allocation8 + $0xf0] sm:$0xff]
    %v597 = vld [vmem:[#allocation8 + $0xf8] sm:$0xff]
    %v598 = vld [vmem:[#allocation8 + $0x100] sm:$0xff]
    %v599 = vld [vmem:[#allocation8 + $0x108] sm:$0xff]
    %v600 = vld [vmem:[#allocation8 + $0x110] sm:$0xff]
    %v601 = vld [vmem:[#allocation8 + $0x118] sm:$0xff]
    %v602 = vld [vmem:[#allocation8 + $0x120] sm:$0xff]
    %v603 = vld [vmem:[#allocation8 + $0x128] sm:$0xff]
    %v604 = vld [vmem:[#allocation8 + $0x130] sm:$0xff]
    %v605 = vld [vmem:[#allocation8 + $0x138] sm:$0xff]
    %v606 = vld [vmem:[#allocation8 + $0x140] sm:$0xff]
    %v607 = vld [vmem:[#allocation8 + $0x148] sm:$0xff]
    %v608 = vld [vmem:[#allocation8 + $0x150] sm:$0xff]
    %v609 = vld [vmem:[#allocation8 + $0x158] sm:$0xff]
    %v610 = vld [vmem:[#allocation8 + $0x160] sm:$0xff]
    %v611 = vld [vmem:[#allocation8 + $0x168] sm:$0xff]
    %v612 = vld [vmem:[#allocation8 + $0x170] sm:$0xff]
    %v613 = vld [vmem:[#allocation8 + $0x178] sm:$0xff]
    %v614 = vld [vmem:[#allocation8 + $0x180] sm:$0xff]
    %v615 = vld [vmem:[#allocation8 + $0x188] sm:$0xff]
    %v616 = vld [vmem:[#allocation8 + $0x190] sm:$0xff]
    %v617 = vld [vmem:[#allocation8 + $0x198] sm:$0xff]
    %v618 = vld [vmem:[#allocation8 + $0x1a0] sm:$0xff]
    %v619 = vld [vmem:[#allocation8 + $0x1a8] sm:$0xff]
    %v620 = vld [vmem:[#allocation8 + $0x1b0] sm:$0xff]
    %v621 = vld [vmem:[#allocation8 + $0x1b8] sm:$0xff]
    %v622 = vld [vmem:[#allocation8 + $0x1c0] sm:$0xff]
    %v623 = vld [vmem:[#allocation8 + $0x1c8] sm:$0xff]
    %v624 = vld [vmem:[#allocation8 + $0x1d0] sm:$0xff]
    %v625 = vld [vmem:[#allocation8 + $0x1d8] sm:$0xff]
    %v626 = vld [vmem:[#allocation8 + $0x1e0] sm:$0xff]
    %v627 = vld [vmem:[#allocation8 + $0x1e8] sm:$0xff]
    %v628 = vld [vmem:[#allocation8 + $0x1f0] sm:$0xff]
    %v629 = vld [vmem:[#allocation8 + $0x1f8] sm:$0xff]
    %630 = vmatpush.msra.mxu0 %v581
    %631 = vmatpush.msra.mxu0 %v580
    %632 = vmatpush.msra.mxu0 %v579
    %633 = vmatpush.msra.mxu0 %v578
    %634 = vmatpush.msra.mxu0 %v577
    %635 = vmatpush.msra.mxu0 %v576
    %636 = vmatpush.msra.mxu0 %v575
    %637 = vmatpush.msra.mxu0 %v574
    %638 = vmatpush.msra.mxu0 %v573
    %639 = vmatpush.msra.mxu0 %v572
    %640 = vmatpush.msra.mxu0 %v571
    %641 = vmatpush.msra.mxu0 %v570
    %642 = vmatpush.msra.mxu0 %v569
    %643 = vmatpush.msra.mxu0 %v568
    %644 = vmatpush.msra.mxu0 %v567
    %645 = vmatpush.msra.mxu0 %v566
    %646 = vmatmul.f32.gmra.mxu0 %v486
    %v647 = vpop.f32.mrf.mxu0
    %v648 = vadd.f32 0.0, %v647
    %649 = vmatmul.f32.gmra.mxu0 %v490
    %v650 = vpop.f32.mrf.mxu0
    %v651 = vadd.f32 0.0, %v650
    %652 = vmatmul.f32.gmra.mxu0 %v494
    %v653 = vpop.f32.mrf.mxu0
    %v654 = vadd.f32 0.0, %v653
    %655 = vmatmul.f32.gmra.mxu0 %v498
    %v656 = vpop.f32.mrf.mxu0
    %v657 = vadd.f32 0.0, %v656
    %658 = vmatmul.f32.gmra.mxu0 %v502
    %v659 = vpop.f32.mrf.mxu0
    %v660 = vadd.f32 0.0, %v659
    %661 = vmatmul.f32.gmra.mxu0 %v506
    %v662 = vpop.f32.mrf.mxu0
    %v663 = vadd.f32 0.0, %v662
    %664 = vmatmul.f32.gmra.mxu0 %v510
    %v665 = vpop.f32.mrf.mxu0
    %v666 = vadd.f32 0.0, %v665
    %667 = vmatmul.f32.gmra.mxu0 %v514
    %v668 = vpop.f32.mrf.mxu0
    %v669 = vadd.f32 0.0, %v668
    %670 = vmatmul.f32.gmra.mxu0 %v518
    %v671 = vpop.f32.mrf.mxu0
    %v672 = vadd.f32 0.0, %v671
    %673 = vmatmul.f32.gmra.mxu0 %v522
    %v674 = vpop.f32.mrf.mxu0
    %v675 = vadd.f32 0.0, %v674
    %676 = vmatmul.f32.gmra.mxu0 %v526
    %v677 = vpop.f32.mrf.mxu0
    %v678 = vadd.f32 0.0, %v677
    %679 = vmatmul.f32.gmra.mxu0 %v530
    %v680 = vpop.f32.mrf.mxu0
    %v681 = vadd.f32 0.0, %v680
    %682 = vmatmul.f32.gmra.mxu0 %v534
    %v683 = vpop.f32.mrf.mxu0
    %v684 = vadd.f32 0.0, %v683
    %685 = vmatmul.f32.gmra.mxu0 %v538
    %v686 = vpop.f32.mrf.mxu0
    %v687 = vadd.f32 0.0, %v686
    %688 = vmatmul.f32.gmra.mxu0 %v542
    %v689 = vpop.f32.mrf.mxu0
    %v690 = vadd.f32 0.0, %v689
    %691 = vmatmul.f32.gmra.mxu0 %v546
    %v692 = vpop.f32.mrf.mxu0
    %v693 = vadd.f32 0.0, %v692
    %694 = vdwg.mxu0
    %695 = vmatpush.msra.mxu0 %v597
    %696 = vmatpush.msra.mxu0 %v596
    %697 = vmatpush.msra.mxu0 %v595
    %698 = vmatpush.msra.mxu0 %v594
    %699 = vmatpush.msra.mxu0 %v593
    %700 = vmatpush.msra.mxu0 %v592
    %701 = vmatpush.msra.mxu0 %v591
    %702 = vmatpush.msra.mxu0 %v590
    %703 = vmatpush.msra.mxu0 %v589
    %704 = vmatpush.msra.mxu0 %v588
    %705 = vmatpush.msra.mxu0 %v587
    %706 = vmatpush.msra.mxu0 %v586
    %707 = vmatpush.msra.mxu0 %v585
    %708 = vmatpush.msra.mxu0 %v584
    %709 = vmatpush.msra.mxu0 %v583
    %710 = vmatpush.msra.mxu0 %v582
    %711 = vmatmul.f32.gmra.mxu0 %v487
    %v712 = vpop.f32.mrf.mxu0
    %v713 = vadd.f32 %v648, %v712
    %714 = vmatmul.f32.gmra.mxu0 %v491
    %v715 = vpop.f32.mrf.mxu0
    %v716 = vadd.f32 %v651, %v715
    %717 = vmatmul.f32.gmra.mxu0 %v495
    %v718 = vpop.f32.mrf.mxu0
    %v719 = vadd.f32 %v654, %v718
    %720 = vmatmul.f32.gmra.mxu0 %v499
    %v721 = vpop.f32.mrf.mxu0
    %v722 = vadd.f32 %v657, %v721
    %723 = vmatmul.f32.gmra.mxu0 %v503
    %v724 = vpop.f32.mrf.mxu0
    %v725 = vadd.f32 %v660, %v724
    %726 = vmatmul.f32.gmra.mxu0 %v507
    %v727 = vpop.f32.mrf.mxu0
    %v728 = vadd.f32 %v663, %v727
    %729 = vmatmul.f32.gmra.mxu0 %v511
    %v730 = vpop.f32.mrf.mxu0
    %v731 = vadd.f32 %v666, %v730
    %732 = vmatmul.f32.gmra.mxu0 %v515
    %v733 = vpop.f32.mrf.mxu0
    %v734 = vadd.f32 %v669, %v733
    %735 = vmatmul.f32.gmra.mxu0 %v519
    %v736 = vpop.f32.mrf.mxu0
    %v737 = vadd.f32 %v672, %v736
    %738 = vmatmul.f32.gmra.mxu0 %v523
    %v739 = vpop.f32.mrf.mxu0
    %v740 = vadd.f32 %v675, %v739
    %741 = vmatmul.f32.gmra.mxu0 %v527
    %v742 = vpop.f32.mrf.mxu0
    %v743 = vadd.f32 %v678, %v742
    %744 = vmatmul.f32.gmra.mxu0 %v531
    %v745 = vpop.f32.mrf.mxu0
    %v746 = vadd.f32 %v681, %v745
    %747 = vmatmul.f32.gmra.mxu0 %v535
    %v748 = vpop.f32.mrf.mxu0
    %v749 = vadd.f32 %v684, %v748
    %750 = vmatmul.f32.gmra.mxu0 %v539
    %v751 = vpop.f32.mrf.mxu0
    %v752 = vadd.f32 %v687, %v751
    %753 = vmatmul.f32.gmra.mxu0 %v543
    %v754 = vpop.f32.mrf.mxu0
    %v755 = vadd.f32 %v690, %v754
    %756 = vmatmul.f32.gmra.mxu0 %v547
    %v757 = vpop.f32.mrf.mxu0
    %v758 = vadd.f32 %v693, %v757
    %759 = vdwg.mxu0
    %760 = vmatpush.msra.mxu0 %v613
    %761 = vmatpush.msra.mxu0 %v612
    %762 = vmatpush.msra.mxu0 %v611
    %763 = vmatpush.msra.mxu0 %v610
    %764 = vmatpush.msra.mxu0 %v609
    %765 = vmatpush.msra.mxu0 %v608
    %766 = vmatpush.msra.mxu0 %v607
    %767 = vmatpush.msra.mxu0 %v606
    %768 = vmatpush.msra.mxu0 %v605
    %769 = vmatpush.msra.mxu0 %v604
    %770 = vmatpush.msra.mxu0 %v603
    %771 = vmatpush.msra.mxu0 %v602
    %772 = vmatpush.msra.mxu0 %v601
    %773 = vmatpush.msra.mxu0 %v600
    %774 = vmatpush.msra.mxu0 %v599
    %775 = vmatpush.msra.mxu0 %v598
    %776 = vmatmul.f32.gmra.mxu0 %v488
    %v777 = vpop.f32.mrf.mxu0
    %v778 = vadd.f32 %v713, %v777
    %779 = vmatmul.f32.gmra.mxu0 %v492
    %v780 = vpop.f32.mrf.mxu0
    %v781 = vadd.f32 %v716, %v780
    %782 = vmatmul.f32.gmra.mxu0 %v496
    %v783 = vpop.f32.mrf.mxu0
    %v784 = vadd.f32 %v719, %v783
    %785 = vmatmul.f32.gmra.mxu0 %v500
    %v786 = vpop.f32.mrf.mxu0
    %v787 = vadd.f32 %v722, %v786
    %788 = vmatmul.f32.gmra.mxu0 %v504
    %v789 = vpop.f32.mrf.mxu0
    %v790 = vadd.f32 %v725, %v789
    %791 = vmatmul.f32.gmra.mxu0 %v508
    %v792 = vpop.f32.mrf.mxu0
    %v793 = vadd.f32 %v728, %v792
    %794 = vmatmul.f32.gmra.mxu0 %v512
    %v795 = vpop.f32.mrf.mxu0
    %v796 = vadd.f32 %v731, %v795
    %797 = vmatmul.f32.gmra.mxu0 %v516
    %v798 = vpop.f32.mrf.mxu0
    %v799 = vadd.f32 %v734, %v798
    %800 = vmatmul.f32.gmra.mxu0 %v520
    %v801 = vpop.f32.mrf.mxu0
    %v802 = vadd.f32 %v737, %v801
    %803 = vmatmul.f32.gmra.mxu0 %v524
    %v804 = vpop.f32.mrf.mxu0
    %v805 = vadd.f32 %v740, %v804
    %806 = vmatmul.f32.gmra.mxu0 %v528
    %v807 = vpop.f32.mrf.mxu0
    %v808 = vadd.f32 %v743, %v807
    %809 = vmatmul.f32.gmra.mxu0 %v532
    %v810 = vpop.f32.mrf.mxu0
    %v811 = vadd.f32 %v746, %v810
    %812 = vmatmul.f32.gmra.mxu0 %v536
    %v813 = vpop.f32.mrf.mxu0
    %v814 = vadd.f32 %v749, %v813
    %815 = vmatmul.f32.gmra.mxu0 %v540
    %v816 = vpop.f32.mrf.mxu0
    %v817 = vadd.f32 %v752, %v816
    %818 = vmatmul.f32.gmra.mxu0 %v544
    %v819 = vpop.f32.mrf.mxu0
    %v820 = vadd.f32 %v755, %v819
    %821 = vmatmul.f32.gmra.mxu0 %v548
    %v822 = vpop.f32.mrf.mxu0
    %v823 = vadd.f32 %v758, %v822
    %824 = vdwg.mxu0
    %825 = vmatpush.msra.mxu0 %v629
    %826 = vmatpush.msra.mxu0 %v628
    %827 = vmatpush.msra.mxu0 %v627
    %828 = vmatpush.msra.mxu0 %v626
    %829 = vmatpush.msra.mxu0 %v625
    %830 = vmatpush.msra.mxu0 %v624
    %831 = vmatpush.msra.mxu0 %v623
    %832 = vmatpush.msra.mxu0 %v622
    %833 = vmatpush.msra.mxu0 %v621
    %834 = vmatpush.msra.mxu0 %v620
    %835 = vmatpush.msra.mxu0 %v619
    %836 = vmatpush.msra.mxu0 %v618
    %837 = vmatpush.msra.mxu0 %v617
    %838 = vmatpush.msra.mxu0 %v616
    %839 = vmatpush.msra.mxu0 %v615
    %840 = vmatpush.msra.mxu0 %v614
    %841 = vmatmul.f32.gmra.mxu0 %v489
    %v842 = vpop.f32.mrf.mxu0
    %v843 = vadd.f32 %v778, %v842
    %844 = vmatmul.f32.gmra.mxu0 %v493
    %v845 = vpop.f32.mrf.mxu0
    %v846 = vadd.f32 %v781, %v845
    %847 = vmatmul.f32.gmra.mxu0 %v497
    %v848 = vpop.f32.mrf.mxu0
    %v849 = vadd.f32 %v784, %v848
    %850 = vmatmul.f32.gmra.mxu0 %v501
    %v851 = vpop.f32.mrf.mxu0
    %v852 = vadd.f32 %v787, %v851
    %853 = vmatmul.f32.gmra.mxu0 %v505
    %v854 = vpop.f32.mrf.mxu0
    %v855 = vadd.f32 %v790, %v854
    %856 = vmatmul.f32.gmra.mxu0 %v509
    %v857 = vpop.f32.mrf.mxu0
    %v858 = vadd.f32 %v793, %v857
    %859 = vmatmul.f32.gmra.mxu0 %v513
    %v860 = vpop.f32.mrf.mxu0
    %v861 = vadd.f32 %v796, %v860
    %862 = vmatmul.f32.gmra.mxu0 %v517
    %v863 = vpop.f32.mrf.mxu0
    %v864 = vadd.f32 %v799, %v863
    %865 = vmatmul.f32.gmra.mxu0 %v521
    %v866 = vpop.f32.mrf.mxu0
    %v867 = vadd.f32 %v802, %v866
    %868 = vmatmul.f32.gmra.mxu0 %v525
    %v869 = vpop.f32.mrf.mxu0
    %v870 = vadd.f32 %v805, %v869
    %871 = vmatmul.f32.gmra.mxu0 %v529
    %v872 = vpop.f32.mrf.mxu0
    %v873 = vadd.f32 %v808, %v872
    %874 = vmatmul.f32.gmra.mxu0 %v533
    %v875 = vpop.f32.mrf.mxu0
    %v876 = vadd.f32 %v811, %v875
    %877 = vmatmul.f32.gmra.mxu0 %v537
    %v878 = vpop.f32.mrf.mxu0
    %v879 = vadd.f32 %v814, %v878
    %880 = vmatmul.f32.gmra.mxu0 %v541
    %v881 = vpop.f32.mrf.mxu0
    %v882 = vadd.f32 %v817, %v881
    %883 = vmatmul.f32.gmra.mxu0 %v545
    %v884 = vpop.f32.mrf.mxu0
    %v885 = vadd.f32 %v820, %v884
    %886 = vmatmul.f32.gmra.mxu0 %v549
    %v887 = vpop.f32.mrf.mxu0
    %v888 = vadd.f32 %v823, %v887
    %889 = vdwg.mxu0
    %v890 = vadd.f32 %v550, %v843
    %v891 = vadd.f32 %v551, %v846
    %v892 = vadd.f32 %v552, %v849
    %v893 = vadd.f32 %v553, %v852
    %v894 = vadd.f32 %v554, %v855
    %v895 = vadd.f32 %v555, %v858
    %v896 = vadd.f32 %v556, %v861
    %v897 = vadd.f32 %v557, %v864
    %v898 = vadd.f32 %v558, %v867
    %v899 = vadd.f32 %v559, %v870
    %v900 = vadd.f32 %v560, %v873
    %v901 = vadd.f32 %v561, %v876
    %v902 = vadd.f32 %v562, %v879
    %v903 = vadd.f32 %v563, %v882
    %v904 = vadd.f32 %v564, %v885
    %v905 = vadd.f32 %v565, %v888
    %906 = vst [vmem:[#allocation2] sm:$0xff] %v890
    %907 = vst [vmem:[#allocation2 + $0x8] sm:$0xff] %v891
    %908 = vst [vmem:[#allocation2 + $0x10] sm:$0xff] %v892
    %909 = vst [vmem:[#allocation2 + $0x18] sm:$0xff] %v893
    %910 = vst [vmem:[#allocation2 + $0x20] sm:$0xff] %v894
    %911 = vst [vmem:[#allocation2 + $0x28] sm:$0xff] %v895
    %912 = vst [vmem:[#allocation2 + $0x30] sm:$0xff] %v896
    %913 = vst [vmem:[#allocation2 + $0x38] sm:$0xff] %v897
    %914 = vst [vmem:[#allocation2 + $0x40] sm:$0xff] %v898
    %915 = vst [vmem:[#allocation2 + $0x48] sm:$0xff] %v899
    %916 = vst [vmem:[#allocation2 + $0x50] sm:$0xff] %v900
    %917 = vst [vmem:[#allocation2 + $0x58] sm:$0xff] %v901
    %918 = vst [vmem:[#allocation2 + $0x60] sm:$0xff] %v902
    %919 = vst [vmem:[#allocation2 + $0x68] sm:$0xff] %v903
    %920 = vst [vmem:[#allocation2 + $0x70] sm:$0xff] %v904
    %921 = vst [vmem:[#allocation2 + $0x78] sm:$0xff] %v905
    // Predicated region
    $region30: #{tpu_custom_call.1} parent=1 // pred_check
      %p922 = pneg %p62
    $region31: #{tpu_custom_call.1} parent=1 // pred_check_branch
      %924 = sbr.rel (%p922) target = $region33
    $region32: #{tpu_custom_call.1} parent=1 // pred_region
      %v925 = vld [vmem:[#allocation2] sm:$0xff]
      %v926 = vld [vmem:[#allocation2 + $0x8] sm:$0xff]
      %v927 = vld [vmem:[#allocation2 + $0x10] sm:$0xff]
      %v928 = vld [vmem:[#allocation2 + $0x18] sm:$0xff]
      %v929 = vld [vmem:[#allocation2 + $0x20] sm:$0xff]
      %v930 = vld [vmem:[#allocation2 + $0x28] sm:$0xff]
      %v931 = vld [vmem:[#allocation2 + $0x30] sm:$0xff]
      %v932 = vld [vmem:[#allocation2 + $0x38] sm:$0xff]
      %v933 = vld [vmem:[#allocation2 + $0x40] sm:$0xff]
      %v934 = vld [vmem:[#allocation2 + $0x48] sm:$0xff]
      %v935 = vld [vmem:[#allocation2 + $0x50] sm:$0xff]
      %v936 = vld [vmem:[#allocation2 + $0x58] sm:$0xff]
      %v937 = vld [vmem:[#allocation2 + $0x60] sm:$0xff]
      %v938 = vld [vmem:[#allocation2 + $0x68] sm:$0xff]
      %v939 = vld [vmem:[#allocation2 + $0x70] sm:$0xff]
      %v940 = vld [vmem:[#allocation2 + $0x78] sm:$0xff]
      %941 = vst [vmem:[#allocation9] sm:$0xff] %v925
      %942 = vst [vmem:[#allocation9 + $0x8] sm:$0xff] %v926
      %943 = vst [vmem:[#allocation9 + $0x10] sm:$0xff] %v927
      %944 = vst [vmem:[#allocation9 + $0x18] sm:$0xff] %v928
      %945 = vst [vmem:[#allocation9 + $0x20] sm:$0xff] %v929
      %946 = vst [vmem:[#allocation9 + $0x28] sm:$0xff] %v930
      %947 = vst [vmem:[#allocation9 + $0x30] sm:$0xff] %v931
      %948 = vst [vmem:[#allocation9 + $0x38] sm:$0xff] %v932
      %949 = vst [vmem:[#allocation9 + $0x40] sm:$0xff] %v933
      %950 = vst [vmem:[#allocation9 + $0x48] sm:$0xff] %v934
      %951 = vst [vmem:[#allocation9 + $0x50] sm:$0xff] %v935
      %952 = vst [vmem:[#allocation9 + $0x58] sm:$0xff] %v936
      %953 = vst [vmem:[#allocation9 + $0x60] sm:$0xff] %v937
      %954 = vst [vmem:[#allocation9 + $0x68] sm:$0xff] %v938
      %955 = vst [vmem:[#allocation9 + $0x70] sm:$0xff] %v939
      %956 = vst [vmem:[#allocation9 + $0x78] sm:$0xff] %v940
    $region33: #{tpu_custom_call.1} parent=1 // pred_fallthru
      _
    // Predicated region
    $region34: #{tpu_custom_call.1} parent=1 // pred_check
      _
    $region35: #{tpu_custom_call.1} parent=1 // pred_check_branch
      %958 = sbr.rel (0) target = $region37
    $region36: #{tpu_custom_call.1} parent=1 // pred_region
      %960 = vsyncadd [#allocation5], 0
      %s961 = sshll.u32 [#allocation9], 4
      %s962 = int_to_ptr.vmem [resolvable:$true] %s961
      %s963 = sshll.u32 %s3, 4
      %s964 = int_to_ptr.hbm [resolvable:$true] %s963
      %969 = dma.vmem_to_hbm [thread:$0]  %s962, 2048, %s964, [#allocation5], 128, 128, 8
    $region37: #{tpu_custom_call.1} parent=1 // pred_fallthru
      _
    // Predicated region
    $region38: #{tpu_custom_call.1} parent=1 // pred_check
      _
    $region39: #{tpu_custom_call.1} parent=1 // pred_check_branch
      %971 = sbr.rel (0) target = $region41
    $region40: #{tpu_custom_call.1} parent=1 // pred_region
      %973 = dma.done [#allocation5], 2048
    $region41: #{tpu_custom_call.1} parent=1 // pred_fallthru
      _
    %974 = vsyncpa [#allocation4], 1
    %975 = vsyncpa [#allocation7], 1
    %976 = vsyncpa [#allocation5], 1

</llo_original>
